<compile_context>
chip_gen: v7x
topology: tpu7x:2x2x1
jax: 0.10.0
libtpu: 0.0.40
codegen_flags: <defaults>
</compile_context>

<pallas_src>
import math

import jax
import jax.numpy as jnp
from jax.experimental import pallas as pl
from jax.experimental.pallas import tpu as pltpu

_MIB = 1024 * 1024
_TARGET_X_BLOCK_BYTES = 4 * _MIB     # HBM-bandwidth sweet spot per grid step
_VMEM_BLOCK_BUDGET = 40 * _MIB       # per-step resident bytes; fits v7x's 64 MiB/TC
_VMEM_LIMIT_BYTES = 48 * _MIB        # scoped VMEM limit (safe on v5e/v6e/v7x)


def attention_kernel(x_ref, w1_ref, b1_ref, w2_ref, b2_ref, o_ref):
    TB, S, D = x_ref.shape
    H = w1_ref.shape[1]

    x = x_ref[...]                                   # (TB, S, D), native dtype

    # Linear(D -> H) + ReLU with f32 MXU accumulation.
    if S % 8 == 0:
        # Free sublane collapse (last dim preserved): MXU sees TB*S rows per pass.
        h = jnp.dot(x.reshape(TB * S, D), w1_ref[...],
                    preferred_element_type=jnp.float32)
        h = (h + b1_ref[...]).reshape(TB, S, H)
    else:
        # Relayout-free fallback when S is not a multiple of 8.
        h = jnp.einsum("bsd,dh->bsh", x, w1_ref[...],
                       preferred_element_type=jnp.float32) + b1_ref[...]
    h = jnp.maximum(h, 0.0)                          # (TB, S, H) f32

    # Linear(H -> 1) as a VPU multiply + cross-lane reduce (no lane-width-1 matmul).
    scores = jnp.sum(h * w2_ref[...], axis=-1, keepdims=True) + b2_ref[...]  # (TB,S,1)

    # Softmax over the sequence axis, per batch row.  (At S >= 128 a lane-major
    # (TB, S) view would keep exp full-width; at small S the 1-lane vregs are cheap.)
    m = jnp.max(scores, axis=1, keepdims=True)       # (TB, 1, 1)
    e = jnp.exp(scores - m)                          # (TB, S, 1)
    denom = jnp.sum(e, axis=1, keepdims=True)        # (TB, 1, 1)
    w = e * pl.reciprocal(denom, approx=True)        # (TB, S, 1), f32, EUP slot

    # attended = sum_s x * w -> (TB, D).  Multiply in x's native dtype, accumulate the
    # reduction in f32: no full-size f32 copy of x is materialized.
    attended = jnp.sum(x * w.astype(x.dtype), axis=1, dtype=jnp.float32)
    o_ref[...] = attended.astype(o_ref.dtype)


def _round_up(n, m):
    return -(-n // m) * m


def _pick_tb(B, S, D, H, x_bytes, out_bytes):
    # Alignment: batch dim sublane-dense (mult. of 8) and TB*S a multiple of 128 so
    # the v5e 4x128 MXU sees full passes.
    align = _round_up(max(8, 128 // math.gcd(S, 128)), 8)

    # Bytes-based target: x block ~4 MiB per grid step (mem-bound regime).
    row_bytes = max(1, S * D * x_bytes)
    tb = max(align, (_TARGET_X_BLOCK_BYTES // row_bytes) // align * align)

    def step_bytes(t):
        return (2 * t * S * D * x_bytes        # x block, double-buffered
                + 2 * t * D * out_bytes        # out block, double-buffered
                + (D * H + 2 * H + 1) * 4      # params, single-buffered
                + t * S * H * 4                # h (f32)
                + t * S * D * x_bytes          # x * w product (native dtype)
                + t * S * 16)                  # softmax intermediates

    while tb > align and step_bytes(tb) > _VMEM_BLOCK_BUDGET:
        tb -= align
    # TODO(synk): if step_bytes(align) still exceeds the budget (very large S*D), add
    # a sequence grid axis ('arbitrary') with an online-softmax accumulator instead of
    # shrinking the batch block further.

    # Don't pad tiny batches to huge blocks, and keep >= 2 grid steps when the batch
    # allows it so the 'parallel' axis shards across v7x's two TensorCores.
    b_cap = _round_up(B, align)
    if b_cap >= 2 * align:
        b_cap = _round_up(-(-b_cap // 2), align)
    return max(align, min(tb, b_cap))


def attention_forward(x, w1, b1, w2, b2, *, tb=None):
    B, S, D = x.shape
    H = w1.shape[1]
    out_dtype = x.dtype
    if tb is None:
        tb = _pick_tb(B, S, D, H, x.dtype.itemsize, jnp.dtype(out_dtype).itemsize)

    # Zero-pad batch to a multiple of tb (zero rows are numerically safe: softmax of a
    # constant score row is uniform and the weighted sum of zeros is zero); the padded
    # rows are sliced off after the call.
    pad = (-B) % tb
    xp = jnp.pad(x, ((0, pad), (0, 0), (0, 0))) if pad else x
    Bp = B + pad

    b1_2d = b1.reshape(1, H)
    w2_row = w2.reshape(1, H)        # (H, 1) -> row vector for the VPU reduction
    b2_2d = b2.reshape(1, 1)

    # Parameters have constant index maps -> single-buffer them; the reclaimed VMEM
    # goes to a bigger batch block instead of a useless second copy.
    def param_spec(shape):
        return pl.BlockSpec(shape, lambda i: (0, 0), pipeline_mode=pl.Buffered(1))

    out = pl.pallas_call(
        attention_kernel,
        out_shape=jax.ShapeDtypeStruct((Bp, D), out_dtype),
        grid_spec=pltpu.PrefetchScalarGridSpec(
            num_scalar_prefetch=0,
            grid=(Bp // tb,),
            in_specs=[
                pl.BlockSpec((tb, S, D), lambda i: (i, 0, 0)),
                param_spec((D, H)),
                param_spec((1, H)),
                param_spec((1, H)),
                param_spec((1, 1)),
            ],
            out_specs=pl.BlockSpec((tb, D), lambda i: (i, 0)),
        ),
        compiler_params=pltpu.CompilerParams(
            dimension_semantics=("parallel",),       # megacore/TC sharding over batch blocks
            vmem_limit_bytes=_VMEM_LIMIT_BYTES,
        ),
    )(xp, w1, b1_2d, w2_row, b2_2d)

    return out[:B] if pad else out


def attention_reference(x, w1, b1, w2, b2):
    # Pure-JAX reference matching the PyTorch forward pass.
    h = jnp.maximum(jnp.einsum("bsd,dh->bsh", x, w1) + b1, 0.0)
    scores = jnp.einsum("bsh,ho->bso", h, w2) + b2            # (B, S, 1)
    weights = jax.nn.softmax(scores, axis=1)
    return jnp.sum(x * weights, axis=1)                        # (B, D)


if __name__ == "__main__":
    B, S, D = 2, 8, 32
    H = D // 2

    key = jax.random.PRNGKey(0)
    kx, k1, k2, k3, k4 = jax.random.split(key, 5)

    # Deterministic parameter init (PyTorch-style uniform bounds).
    bound1 = 1.0 / (D ** 0.5)
    bound2 = 1.0 / (H ** 0.5)
    x = jax.random.normal(kx, (B, S, D), dtype=jnp.float32)
    w1 = jax.random.uniform(k1, (D, H), jnp.float32, -bound1, bound1)
    b1 = jax.random.uniform(k2, (H,), jnp.float32, -bound1, bound1)
    w2 = jax.random.uniform(k3, (H, 1), jnp.float32, -bound2, bound2)
    b2 = jax.random.uniform(k4, (1,), jnp.float32, -bound2, bound2)

    out = jax.block_until_ready(attention_forward(x, w1, b1, w2, b2))
    ref = attention_reference(x, w1, b1, w2, b2)

    assert out.shape == (B, D)
    # Slightly relaxed tolerance to cover the approx (EUP) reciprocal in the softmax.
    assert jnp.allclose(out, ref, atol=1e-3, rtol=1e-3), "mismatch vs reference"

    print("KERNEL_OK")
</pallas_src>

<mosaic_0001>
module attributes {stable_mosaic.version = 11 : i64} {
  func.func @attention_kernel(%arg0: i32, %arg1: memref<16x8x32xf32, #tpu.memory_space<vmem>>, %arg2: memref<32x16xf32, #tpu.memory_space<vmem>>, %arg3: memref<1x16xf32, #tpu.memory_space<vmem>>, %arg4: memref<1x16xf32, #tpu.memory_space<vmem>>, %arg5: memref<1x1xf32, #tpu.memory_space<vmem>>, %arg6: memref<16x32xf32, #tpu.memory_space<vmem>>) attributes {dimension_semantics = [#tpu.dimension_semantics<parallel>], iteration_bounds = array<i64: 1>, scalar_prefetch = 0 : i64, scratch_operands = 0 : i64, tpu.core_type = #tpu.core_type<tc>, window_params = [{transform_indices = @transform_0, window_bounds = array<i64: 16, 8, 32>}, {pipeline_mode = #tpu.pipeline_mode<synchronous>, transform_indices = @transform_1, window_bounds = array<i64: 32, 16>}, {pipeline_mode = #tpu.pipeline_mode<synchronous>, transform_indices = @transform_2, window_bounds = array<i64: 1, 16>}, {pipeline_mode = #tpu.pipeline_mode<synchronous>, transform_indices = @transform_3, window_bounds = array<i64: 1, 16>}, {pipeline_mode = #tpu.pipeline_mode<synchronous>, transform_indices = @transform_4, window_bounds = array<i64: 1, 1>}, {transform_indices = @transform_5, window_bounds = array<i64: 16, 32>}]} {
    %c0 = arith.constant 0 : index
    %c0_0 = arith.constant 0 : index
    %c0_1 = arith.constant 0 : index
    %0 = vector.load %arg1[%c0, %c0_0, %c0_1] : memref<16x8x32xf32, #tpu.memory_space<vmem>>, vector<16x8x32xf32>
    %1 = vector.shape_cast %0 : vector<16x8x32xf32> to vector<128x32xf32>
    %c0_2 = arith.constant 0 : index
    %c0_3 = arith.constant 0 : index
    %2 = vector.load %arg2[%c0_2, %c0_3] : memref<32x16xf32, #tpu.memory_space<vmem>>, vector<32x16xf32>
    %cst = arith.constant dense<0.000000e+00> : vector<128x16xf32>
    %3 = tpu.matmul %1, %2, %cst {dimension_numbers = #tpu.dot_dimension_numbers<[1], [0], [0], [1], [0, 0, 1, 1], [], []>} : vector<128x32xf32>, vector<32x16xf32>, vector<128x16xf32> -> vector<128x16xf32>
    %c0_4 = arith.constant 0 : index
    %c0_5 = arith.constant 0 : index
    %4 = vector.load %arg3[%c0_4, %c0_5] : memref<1x16xf32, #tpu.memory_space<vmem>>, vector<1x16xf32>
    %5 = vector.broadcast %4 : vector<1x16xf32> to vector<128x16xf32>
    %6 = arith.addf %3, %5 : vector<128x16xf32>
    %7 = vector.shape_cast %6 : vector<128x16xf32> to vector<16x8x16xf32>
    %cst_6 = arith.constant 0.000000e+00 : f32
    %8 = vector.broadcast %cst_6 : f32 to vector<16x8x16xf32>
    %9 = arith.maximumf %7, %8 : vector<16x8x16xf32>
    %c0_7 = arith.constant 0 : index
    %c0_8 = arith.constant 0 : index
    %10 = vector.load %arg4[%c0_7, %c0_8] : memref<1x16xf32, #tpu.memory_space<vmem>>, vector<1x16xf32>
    %11 = vector.shape_cast %10 : vector<1x16xf32> to vector<1x1x16xf32>
    %12 = vector.broadcast %11 : vector<1x1x16xf32> to vector<16x8x16xf32>
    %13 = arith.mulf %9, %12 : vector<16x8x16xf32>
    %cst_9 = arith.constant dense<0.000000e+00> : vector<16x8xf32>
    %14 = vector.multi_reduction <add>, %13, %cst_9 [2] : vector<16x8x16xf32> to vector<16x8xf32>
    %15 = vector.shape_cast %14 : vector<16x8xf32> to vector<16x8x1xf32>
    %c0_10 = arith.constant 0 : index
    %c0_11 = arith.constant 0 : index
    %16 = vector.load %arg5[%c0_10, %c0_11] : memref<1x1xf32, #tpu.memory_space<vmem>>, vector<1x1xf32>
    %17 = vector.shape_cast %16 : vector<1x1xf32> to vector<1x1x1xf32>
    %18 = vector.broadcast %17 : vector<1x1x1xf32> to vector<16x8x1xf32>
    %19 = arith.addf %15, %18 : vector<16x8x1xf32>
    %cst_12 = arith.constant dense<0xFF800000> : vector<16x1xf32>
    %20 = vector.multi_reduction <maximumf>, %19, %cst_12 [1] : vector<16x8x1xf32> to vector<16x1xf32>
    %21 = vector.shape_cast %20 : vector<16x1xf32> to vector<16x1x1xf32>
    %22 = vector.broadcast %21 : vector<16x1x1xf32> to vector<16x8x1xf32>
    %23 = arith.subf %19, %22 : vector<16x8x1xf32>
    %24 = math.exp %23 : vector<16x8x1xf32>
    %cst_13 = arith.constant dense<0.000000e+00> : vector<16x1xf32>
    %25 = vector.multi_reduction <add>, %24, %cst_13 [1] : vector<16x8x1xf32> to vector<16x1xf32>
    %26 = vector.shape_cast %25 : vector<16x1xf32> to vector<16x1x1xf32>
    %27 = tpu.reciprocal %26 {approx = true} : vector<16x1x1xf32> -> vector<16x1x1xf32>
    %28 = vector.broadcast %27 : vector<16x1x1xf32> to vector<16x8x1xf32>
    %29 = arith.mulf %24, %28 : vector<16x8x1xf32>
    %30 = vector.broadcast %29 : vector<16x8x1xf32> to vector<16x8x32xf32>
    %31 = arith.mulf %0, %30 : vector<16x8x32xf32>
    %cst_14 = arith.constant dense<0.000000e+00> : vector<16x32xf32>
    %32 = vector.multi_reduction <add>, %31, %cst_14 [1] : vector<16x8x32xf32> to vector<16x32xf32>
    %c0_15 = arith.constant 0 : index
    %c0_16 = arith.constant 0 : index
    %33 = vector.load %arg6[%c0_15, %c0_16] : memref<16x32xf32, #tpu.memory_space<vmem>>, vector<16x32xf32>
    tpu.vector_store %arg6[%c0_15, %c0_16], %32 {strides = array<i32>} : memref<16x32xf32, #tpu.memory_space<vmem>>, vector<16x32xf32>,
    return
  }
  func.func @transform_0(%arg0: i32) -> (i32, i32, i32) {
    %c0_i32 = arith.constant 0 : i32
    %c0_i32_0 = arith.constant 0 : i32
    %c0_i32_1 = arith.constant 0 : i32
    return %arg0, %c0_i32, %c0_i32_0 : i32, i32, i32
  }
  func.func @transform_1(%arg0: i32) -> (i32, i32) {
    %c0_i32 = arith.constant 0 : i32
    %c0_i32_0 = arith.constant 0 : i32
    %c0_i32_1 = arith.constant 0 : i32
    return %c0_i32, %c0_i32_0 : i32, i32
  }
  func.func @transform_2(%arg0: i32) -> (i32, i32) {
    %c0_i32 = arith.constant 0 : i32
    %c0_i32_0 = arith.constant 0 : i32
    %c0_i32_1 = arith.constant 0 : i32
    return %c0_i32, %c0_i32_0 : i32, i32
  }
  func.func @transform_3(%arg0: i32) -> (i32, i32) {
    %c0_i32 = arith.constant 0 : i32
    %c0_i32_0 = arith.constant 0 : i32
    %c0_i32_1 = arith.constant 0 : i32
    return %c0_i32, %c0_i32_0 : i32, i32
  }
  func.func @transform_4(%arg0: i32) -> (i32, i32) {
    %c0_i32 = arith.constant 0 : i32
    %c0_i32_0 = arith.constant 0 : i32
    %c0_i32_1 = arith.constant 0 : i32
    return %c0_i32, %c0_i32_0 : i32, i32
  }
  func.func @transform_5(%arg0: i32) -> (i32, i32) {
    %c0_i32 = arith.constant 0 : i32
    %c0_i32_0 = arith.constant 0 : i32
    return %arg0, %c0_i32 : i32, i32
  }
}

</mosaic_0001>

<llo_original>
// kernel: tpu_custom_call.1
$region0: #{tpu_custom_call.1}
  #allocation0 [shape = 'u32[]', space=smem, size = 0x4, offset = 0x4, fixed_abs, tag = 'smem constant byte address 0x4 - core index']
  #allocation1 [shape = 'u32[144,128]{1,0:T(1,128)}', space=vmem, size = 0x12000, scoped, tag = 'internal scratch']
  #allocation2 [shape = 'f32[1,1]{1,0:T(1,128)S(1)}', space=vmem, size = 0x200, scoped, tag = 'scoped memory for tpu_custom_call.1']
  %s0 = inlined_call_operand.hbm [shape: f32[16,8,32], index: 0, kind: input, shape index: {}]
  %s1 = inlined_call_operand.vmem [shape: f32[32,16], index: 1, kind: input, shape index: {}]
  %s2 = inlined_call_operand.vmem [shape: f32[1,16], index: 2, kind: input, shape index: {}]
  %s3 = inlined_call_operand.vmem [shape: f32[1,16], index: 3, kind: input, shape index: {}]
  %s4 = inlined_call_operand.<no memory space> [shape: f32[1,1], index: 4, kind: input, shape index: {}]
  %s5 = inlined_call_operand.hbm [shape: f32[16,32], index: 5, kind: output, shape index: {}]
  %s6 = sld [smem:[#allocation0]]
  $region34: #{tpu_custom_call.1} parent=0
    _
  %s8 = ssub.s32 1, %s6
  %s9 = scalar_select 0, %s8, %s6
  %v10 = vstv %s4
  %11 = vst [vmem:[#allocation2] sm:$0x1] %v10
  $region1: #{tpu_custom_call.1} parent=0
    #allocation3 [shape = 'u8[65536]{0}', space=vmem, size = 0x10000, scoped, tag = 'input window, operand 0, single buffered']
    #allocation4 [shape = 's32[1]{0}', space=sflag, size = 0x4, scoped, tag = 'scoped memory for tpu_custom_call.1']
    #allocation5 [shape = 's32[1]{0}', space=sflag, size = 0x4, scoped, tag = 'scoped memory for tpu_custom_call.1']
    #allocation6 [shape = 'u8[8192]{0}', space=vmem, size = 0x2000, scoped, tag = 'output window, operand 0, single buffered']
    %12 = vsyncpa [#allocation4], 0
    %13 = vsyncpa [#allocation5], 0
    // Predicated region
    $region2: #{tpu_custom_call.1} parent=1 // pred_check
      _
    $region3: #{tpu_custom_call.1} parent=1 // pred_check_branch
      %15 = sbr.rel (0) target = $region5
    $region4: #{tpu_custom_call.1} parent=1 // pred_region
      %s17 = ssub.s32 2048, 2048
      %18 = vsyncadd [#allocation4], %s17
      %s19 = sshll.u32 [#allocation3], 4
      %s20 = int_to_ptr.vmem [resolvable:$true] %s19
      %25 = dma.hbm_to_vmem [thread:$0]  %s0, 2048, %s20, [#allocation4], 128, 128, 8
    $region5: #{tpu_custom_call.1} parent=1 // pred_fallthru
      _
    // Predicated region
    $region6: #{tpu_custom_call.1} parent=1 // pred_check
      _
    $region7: #{tpu_custom_call.1} parent=1 // pred_check_branch
      %27 = sbr.rel (0) target = $region9
    $region8: #{tpu_custom_call.1} parent=1 // pred_region
      _
    $region9: #{tpu_custom_call.1} parent=1 // pred_fallthru
      _
    // Predicated region
    $region10: #{tpu_custom_call.1} parent=1 // pred_check
      _
    $region11: #{tpu_custom_call.1} parent=1 // pred_check_branch
      %29 = sbr.rel (0) target = $region13
    $region12: #{tpu_custom_call.1} parent=1 // pred_region
      _
    $region13: #{tpu_custom_call.1} parent=1 // pred_fallthru
      _
    // Predicated region
    $region14: #{tpu_custom_call.1} parent=1 // pred_check
      _
    $region15: #{tpu_custom_call.1} parent=1 // pred_check_branch
      %31 = sbr.rel (0) target = $region17
    $region16: #{tpu_custom_call.1} parent=1 // pred_region
      _
    $region17: #{tpu_custom_call.1} parent=1 // pred_fallthru
      _
    // Predicated region
    $region18: #{tpu_custom_call.1} parent=1 // pred_check
      _
    $region19: #{tpu_custom_call.1} parent=1 // pred_check_branch
      %33 = sbr.rel (0) target = $region21
    $region20: #{tpu_custom_call.1} parent=1 // pred_region
      _
    $region21: #{tpu_custom_call.1} parent=1 // pred_fallthru
      _
    // Predicated region
    $region22: #{tpu_custom_call.1} parent=1 // pred_check
      _
    $region23: #{tpu_custom_call.1} parent=1 // pred_check_branch
      %35 = sbr.rel (0) target = $region25
    $region24: #{tpu_custom_call.1} parent=1 // pred_region
      %36 = dma.done [#allocation4], 2048
    $region25: #{tpu_custom_call.1} parent=1 // pred_fallthru
      _
    %v37 = vld [vmem:[#allocation3] sm:$0xff]
    %v38 = vld [vmem:[#allocation3 + $0x8] sm:$0xff]
    %v39 = vld [vmem:[#allocation3 + $0x10] sm:$0xff]
    %v40 = vld [vmem:[#allocation3 + $0x18] sm:$0xff]
    %v41 = vld [vmem:[#allocation3 + $0x20] sm:$0xff]
    %v42 = vld [vmem:[#allocation3 + $0x28] sm:$0xff]
    %v43 = vld [vmem:[#allocation3 + $0x30] sm:$0xff]
    %v44 = vld [vmem:[#allocation3 + $0x38] sm:$0xff]
    %v45 = vld [vmem:[#allocation3 + $0x40] sm:$0xff]
    %v46 = vld [vmem:[#allocation3 + $0x48] sm:$0xff]
    %v47 = vld [vmem:[#allocation3 + $0x50] sm:$0xff]
    %v48 = vld [vmem:[#allocation3 + $0x58] sm:$0xff]
    %v49 = vld [vmem:[#allocation3 + $0x60] sm:$0xff]
    %v50 = vld [vmem:[#allocation3 + $0x68] sm:$0xff]
    %v51 = vld [vmem:[#allocation3 + $0x70] sm:$0xff]
    %v52 = vld [vmem:[#allocation3 + $0x78] sm:$0xff]
    %v53 = vld [vmem:[%s1] sm:$0xff]
    %v54 = vld [vmem:[%s1 + $0x8] sm:$0xff]
    %v55 = vld [vmem:[%s1 + $0x10] sm:$0xff]
    %v56 = vld [vmem:[%s1 + $0x18] sm:$0xff]
    %v57 = vld [vmem:[%s2] sm:$0x1]
    %v59 = vlaneseq
    %v60 = vshrl.u32 %v59, 7
    %v61 = vsub.s32 0, %v60
    %v62 = vrot.slane %v57, %v61
    %vm64 = vcmask 261120
    %v66 = vsel %vm64, %v37, 0
    %v69 = vsel %vm64, %v38, 0
    %v72 = vsel %vm64, %v39, 0
    %v75 = vsel %vm64, %v40, 0
    %v78 = vsel %vm64, %v41, 0
    %v81 = vsel %vm64, %v42, 0
    %v84 = vsel %vm64, %v43, 0
    %v87 = vsel %vm64, %v44, 0
    %v90 = vsel %vm64, %v45, 0
    %v93 = vsel %vm64, %v46, 0
    %v96 = vsel %vm64, %v47, 0
    %v99 = vsel %vm64, %v48, 0
    %v102 = vsel %vm64, %v49, 0
    %v105 = vsel %vm64, %v50, 0
    %v108 = vsel %vm64, %v51, 0
    %v111 = vsel %vm64, %v52, 0
    %113 = vmatprep.subr.mxu0 0.0
    %114 = vmatpush1.msra.mxu0 %v53
    %115 = vmatprep.subr.mxu0 0.0
    %116 = vmatpush1.msra.mxu0 %v54
    %117 = vmatprep.subr.mxu0 0.0
    %118 = vmatpush1.msra.mxu0 %v55
    %119 = vmatprep.subr.mxu0 0.0
    %120 = vmatpush1.msra.mxu0 %v56
    %121 = vmatprep.subr.mxu0 0.0
    %122 = vmatpush1.msra.mxu0 0.0
    %123 = vmatprep.subr.mxu0 0.0
    %124 = vmatpush1.msra.mxu0 0.0
    %125 = vmatprep.subr.mxu0 0.0
    %126 = vmatpush1.msra.mxu0 0.0
    %127 = vmatprep.subr.mxu0 0.0
    %128 = vmatpush1.msra.mxu0 0.0
    %129 = vmatprep.subr.mxu0 0.0
    %130 = vmatpush1.msra.mxu0 0.0
    %131 = vmatprep.subr.mxu0 0.0
    %132 = vmatpush1.msra.mxu0 0.0
    %133 = vmatprep.subr.mxu0 0.0
    %134 = vmatpush1.msra.mxu0 0.0
    %135 = vmatprep.subr.mxu0 0.0
    %136 = vmatpush1.msra.mxu0 0.0
    %137 = vmatprep.subr.mxu0 0.0
    %138 = vmatpush1.msra.mxu0 0.0
    %139 = vmatprep.subr.mxu0 0.0
    %140 = vmatpush1.msra.mxu0 0.0
    %141 = vmatprep.subr.mxu0 0.0
    %142 = vmatpush1.msra.mxu0 0.0
    %143 = vmatprep.subr.mxu0 0.0
    %144 = vmatpush1.msra.mxu0 0.0
    %145 = vmatprep.subr.mxu0 0.0
    %146 = vmatpush1.msra.mxu0 0.0
    %147 = vmatprep.subr.mxu0 0.0
    %148 = vmatpush1.msra.mxu0 0.0
    %149 = vmatprep.subr.mxu0 0.0
    %150 = vmatpush1.msra.mxu0 0.0
    %151 = vmatprep.subr.mxu0 0.0
    %152 = vmatpush1.msra.mxu0 0.0
    %153 = vmatprep.subr.mxu0 0.0
    %154 = vmatpush1.msra.mxu0 0.0
    %155 = vmatprep.subr.mxu0 0.0
    %156 = vmatpush1.msra.mxu0 0.0
    %157 = vmatprep.subr.mxu0 0.0
    %158 = vmatpush1.msra.mxu0 0.0
    %159 = vmatprep.subr.mxu0 0.0
    %160 = vmatpush1.msra.mxu0 0.0
    %161 = vmatprep.subr.mxu0 0.0
    %162 = vmatpush1.msra.mxu0 0.0
    %163 = vmatprep.subr.mxu0 0.0
    %164 = vmatpush1.msra.mxu0 0.0
    %165 = vmatprep.subr.mxu0 0.0
    %166 = vmatpush1.msra.mxu0 0.0
    %167 = vmatprep.subr.mxu0 0.0
    %168 = vmatpush1.msra.mxu0 0.0
    %169 = vmatprep.subr.mxu0 0.0
    %170 = vmatpush1.msra.mxu0 0.0
    %171 = vmatprep.subr.mxu0 0.0
    %172 = vmatpush1.msra.mxu0 0.0
    %173 = vmatprep.subr.mxu0 0.0
    %174 = vmatpush1.msra.mxu0 0.0
    %175 = vmatprep.subr.mxu0 0.0
    %176 = vmatpush1.msra.mxu0 0.0
    %177 = vmatprep.mubr.f32.mxu0 0.0
    %178 = vmatmul.mubr.f32.gmra.mrb[0].mxu0 %v66
    %v179 = vpop.f32.mrb[0].mxu0
    %v180 = vadd.f32 %v62, %v179
    %v181 = vpop.f32.mrb[0].mxu0
    %182 = vmatprep.mubr.f32.mxu0 0.0
    %183 = vmatmul.mubr.f32.gmra.mrb[0].mxu0 %v69
    %v184 = vpop.f32.mrb[0].mxu0
    %v185 = vadd.f32 %v62, %v184
    %v186 = vpop.f32.mrb[0].mxu0
    %187 = vmatprep.mubr.f32.mxu0 0.0
    %188 = vmatmul.mubr.f32.gmra.mrb[0].mxu0 %v72
    %v189 = vpop.f32.mrb[0].mxu0
    %v190 = vadd.f32 %v62, %v189
    %v191 = vpop.f32.mrb[0].mxu0
    %192 = vmatprep.mubr.f32.mxu0 0.0
    %193 = vmatmul.mubr.f32.gmra.mrb[0].mxu0 %v75
    %v194 = vpop.f32.mrb[0].mxu0
    %v195 = vadd.f32 %v62, %v194
    %v196 = vpop.f32.mrb[0].mxu0
    %197 = vmatprep.mubr.f32.mxu0 0.0
    %198 = vmatmul.mubr.f32.gmra.mrb[0].mxu0 %v78
    %v199 = vpop.f32.mrb[0].mxu0
    %v200 = vadd.f32 %v62, %v199
    %v201 = vpop.f32.mrb[0].mxu0
    %202 = vmatprep.mubr.f32.mxu0 0.0
    %203 = vmatmul.mubr.f32.gmra.mrb[0].mxu0 %v81
    %v204 = vpop.f32.mrb[0].mxu0
    %v205 = vadd.f32 %v62, %v204
    %v206 = vpop.f32.mrb[0].mxu0
    %207 = vmatprep.mubr.f32.mxu0 0.0
    %208 = vmatmul.mubr.f32.gmra.mrb[0].mxu0 %v84
    %v209 = vpop.f32.mrb[0].mxu0
    %v210 = vadd.f32 %v62, %v209
    %v211 = vpop.f32.mrb[0].mxu0
    %212 = vmatprep.mubr.f32.mxu0 0.0
    %213 = vmatmul.mubr.f32.gmra.mrb[0].mxu0 %v87
    %v214 = vpop.f32.mrb[0].mxu0
    %v215 = vadd.f32 %v62, %v214
    %v216 = vpop.f32.mrb[0].mxu0
    %217 = vmatprep.mubr.f32.mxu0 0.0
    %218 = vmatmul.mubr.f32.gmra.mrb[0].mxu0 %v90
    %v219 = vpop.f32.mrb[0].mxu0
    %v220 = vadd.f32 %v62, %v219
    %v221 = vpop.f32.mrb[0].mxu0
    %222 = vmatprep.mubr.f32.mxu0 0.0
    %223 = vmatmul.mubr.f32.gmra.mrb[0].mxu0 %v93
    %v224 = vpop.f32.mrb[0].mxu0
    %v225 = vadd.f32 %v62, %v224
    %v226 = vpop.f32.mrb[0].mxu0
    %227 = vmatprep.mubr.f32.mxu0 0.0
    %228 = vmatmul.mubr.f32.gmra.mrb[0].mxu0 %v96
    %v229 = vpop.f32.mrb[0].mxu0
    %v230 = vadd.f32 %v62, %v229
    %v231 = vpop.f32.mrb[0].mxu0
    %232 = vmatprep.mubr.f32.mxu0 0.0
    %233 = vmatmul.mubr.f32.gmra.mrb[0].mxu0 %v99
    %v234 = vpop.f32.mrb[0].mxu0
    %v235 = vadd.f32 %v62, %v234
    %v236 = vpop.f32.mrb[0].mxu0
    %237 = vmatprep.mubr.f32.mxu0 0.0
    %238 = vmatmul.mubr.f32.gmra.mrb[0].mxu0 %v102
    %v239 = vpop.f32.mrb[0].mxu0
    %v240 = vadd.f32 %v62, %v239
    %v241 = vpop.f32.mrb[0].mxu0
    %242 = vmatprep.mubr.f32.mxu0 0.0
    %243 = vmatmul.mubr.f32.gmra.mrb[0].mxu0 %v105
    %v244 = vpop.f32.mrb[0].mxu0
    %v245 = vadd.f32 %v62, %v244
    %v246 = vpop.f32.mrb[0].mxu0
    %247 = vmatprep.mubr.f32.mxu0 0.0
    %248 = vmatmul.mubr.f32.gmra.mrb[0].mxu0 %v108
    %v249 = vpop.f32.mrb[0].mxu0
    %v250 = vadd.f32 %v62, %v249
    %v251 = vpop.f32.mrb[0].mxu0
    %252 = vmatprep.mubr.f32.mxu0 0.0
    %253 = vmatmul.mubr.f32.gmra.mrb[0].mxu0 %v111
    %v254 = vpop.f32.mrb[0].mxu0
    %v255 = vadd.f32 %v62, %v254
    %v256 = vpop.f32.mrb[0].mxu0
    %257 = vdwg.mxu0
    %v258 = vmax.f32 %v180, 0.0
    %v259 = vmax.f32 %v185, 0.0
    %v260 = vmax.f32 %v190, 0.0
    %v261 = vmax.f32 %v195, 0.0
    %v262 = vmax.f32 %v200, 0.0
    %v263 = vmax.f32 %v205, 0.0
    %v264 = vmax.f32 %v210, 0.0
    %v265 = vmax.f32 %v215, 0.0
    %v266 = vmax.f32 %v220, 0.0
    %v267 = vmax.f32 %v225, 0.0
    %v268 = vmax.f32 %v230, 0.0
    %v269 = vmax.f32 %v235, 0.0
    %v270 = vmax.f32 %v240, 0.0
    %v271 = vmax.f32 %v245, 0.0
    %v272 = vmax.f32 %v250, 0.0
    %v273 = vmax.f32 %v255, 0.0
    %v274 = vld [vmem:[%s3] sm:$0x1]
    %v276 = vlaneseq
    %v277 = vshrl.u32 %v276, 7
    %v278 = vsub.s32 0, %v277
    %v279 = vrot.slane %v274, %v278
    %v281 = vmul.f32 %v258, %v279
    %v282 = vmul.f32 %v259, %v279
    %v283 = vmul.f32 %v260, %v279
    %v284 = vmul.f32 %v261, %v279
    %v285 = vmul.f32 %v262, %v279
    %v286 = vmul.f32 %v263, %v279
    %v287 = vmul.f32 %v264, %v279
    %v288 = vmul.f32 %v265, %v279
    %v289 = vmul.f32 %v266, %v279
    %v290 = vmul.f32 %v267, %v279
    %v291 = vmul.f32 %v268, %v279
    %v292 = vmul.f32 %v269, %v279
    %v293 = vmul.f32 %v270, %v279
    %v294 = vmul.f32 %v271, %v279
    %v295 = vmul.f32 %v272, %v279
    %v296 = vmul.f32 %v273, %v279
    %vm297 = vcmask 130048
    %v298 = vsel %vm297, %v281, 0.0
    %299 = vadd.xlane.f32.xlu0 %v298
    %v300 = vpop.xlane.xlu0 %299
    %v301 = vsel %vm297, %v282, 0.0
    %302 = vadd.xlane.f32.xlu0 %v301
    %v303 = vpop.xlane.xlu0 %302
    %v304 = vsel %vm297, %v283, 0.0
    %305 = vadd.xlane.f32.xlu0 %v304
    %v306 = vpop.xlane.xlu0 %305
    %v307 = vsel %vm297, %v284, 0.0
    %308 = vadd.xlane.f32.xlu0 %v307
    %v309 = vpop.xlane.xlu0 %308
    %v310 = vsel %vm297, %v285, 0.0
    %311 = vadd.xlane.f32.xlu0 %v310
    %v312 = vpop.xlane.xlu0 %311
    %v313 = vsel %vm297, %v286, 0.0
    %314 = vadd.xlane.f32.xlu0 %v313
    %v315 = vpop.xlane.xlu0 %314
    %v316 = vsel %vm297, %v287, 0.0
    %317 = vadd.xlane.f32.xlu0 %v316
    %v318 = vpop.xlane.xlu0 %317
    %v319 = vsel %vm297, %v288, 0.0
    %320 = vadd.xlane.f32.xlu0 %v319
    %v321 = vpop.xlane.xlu0 %320
    %v322 = vsel %vm297, %v289, 0.0
    %323 = vadd.xlane.f32.xlu0 %v322
    %v324 = vpop.xlane.xlu0 %323
    %v325 = vsel %vm297, %v290, 0.0
    %326 = vadd.xlane.f32.xlu0 %v325
    %v327 = vpop.xlane.xlu0 %326
    %v328 = vsel %vm297, %v291, 0.0
    %329 = vadd.xlane.f32.xlu0 %v328
    %v330 = vpop.xlane.xlu0 %329
    %v331 = vsel %vm297, %v292, 0.0
    %332 = vadd.xlane.f32.xlu0 %v331
    %v333 = vpop.xlane.xlu0 %332
    %v334 = vsel %vm297, %v293, 0.0
    %335 = vadd.xlane.f32.xlu0 %v334
    %v336 = vpop.xlane.xlu0 %335
    %v337 = vsel %vm297, %v294, 0.0
    %338 = vadd.xlane.f32.xlu0 %v337
    %v339 = vpop.xlane.xlu0 %338
    %v340 = vsel %vm297, %v295, 0.0
    %341 = vadd.xlane.f32.xlu0 %v340
    %v342 = vpop.xlane.xlu0 %341
    %v343 = vsel %vm297, %v296, 0.0
    %344 = vadd.xlane.f32.xlu0 %v343
    %v345 = vpop.xlane.xlu0 %344
    %v346 = vld [vmem:[#allocation2] sm:$0x1]
    %v348 = vlaneseq
    %v349 = vshrl.u32 %v348, 7
    %v350 = vsub.s32 0, %v349
    %v351 = vrot.slane %v346, %v350
    %v353 = vadd.f32 %v300, %v351
    %v354 = vadd.f32 %v303, %v351
    %v355 = vadd.f32 %v306, %v351
    %v356 = vadd.f32 %v309, %v351
    %v357 = vadd.f32 %v312, %v351
    %v358 = vadd.f32 %v315, %v351
    %v359 = vadd.f32 %v318, %v351
    %v360 = vadd.f32 %v321, %v351
    %v361 = vadd.f32 %v324, %v351
    %v362 = vadd.f32 %v327, %v351
    %v363 = vadd.f32 %v330, %v351
    %v364 = vadd.f32 %v333, %v351
    %v365 = vadd.f32 %v336, %v351
    %v366 = vadd.f32 %v339, %v351
    %v367 = vadd.f32 %v342, %v351
    %v368 = vadd.f32 %v345, %v351
    %vm369 = vcmask 7168
    %v370 = vsel %vm369, %v353, -inf
    %v371 = vrot.slane %v370, 4
    %v372 = vmax.f32 %v370, %v371
    %v373 = vrot.slane %v372, 2
    %v374 = vmax.f32 %v372, %v373
    %v375 = vrot.slane %v374, 1
    %v376 = vmax.f32 %v374, %v375
    %v377 = vsel %vm369, %v354, -inf
    %v378 = vrot.slane %v377, 4
    %v379 = vmax.f32 %v377, %v378
    %v380 = vrot.slane %v379, 2
    %v381 = vmax.f32 %v379, %v380
    %v382 = vrot.slane %v381, 1
    %v383 = vmax.f32 %v381, %v382
    %v384 = vsel %vm369, %v355, -inf
    %v385 = vrot.slane %v384, 4
    %v386 = vmax.f32 %v384, %v385
    %v387 = vrot.slane %v386, 2
    %v388 = vmax.f32 %v386, %v387
    %v389 = vrot.slane %v388, 1
    %v390 = vmax.f32 %v388, %v389
    %v391 = vsel %vm369, %v356, -inf
    %v392 = vrot.slane %v391, 4
    %v393 = vmax.f32 %v391, %v392
    %v394 = vrot.slane %v393, 2
    %v395 = vmax.f32 %v393, %v394
    %v396 = vrot.slane %v395, 1
    %v397 = vmax.f32 %v395, %v396
    %v398 = vsel %vm369, %v357, -inf
    %v399 = vrot.slane %v398, 4
    %v400 = vmax.f32 %v398, %v399
    %v401 = vrot.slane %v400, 2
    %v402 = vmax.f32 %v400, %v401
    %v403 = vrot.slane %v402, 1
    %v404 = vmax.f32 %v402, %v403
    %v405 = vsel %vm369, %v358, -inf
    %v406 = vrot.slane %v405, 4
    %v407 = vmax.f32 %v405, %v406
    %v408 = vrot.slane %v407, 2
    %v409 = vmax.f32 %v407, %v408
    %v410 = vrot.slane %v409, 1
    %v411 = vmax.f32 %v409, %v410
    %v412 = vsel %vm369, %v359, -inf
    %v413 = vrot.slane %v412, 4
    %v414 = vmax.f32 %v412, %v413
    %v415 = vrot.slane %v414, 2
    %v416 = vmax.f32 %v414, %v415
    %v417 = vrot.slane %v416, 1
    %v418 = vmax.f32 %v416, %v417
    %v419 = vsel %vm369, %v360, -inf
    %v420 = vrot.slane %v419, 4
    %v421 = vmax.f32 %v419, %v420
    %v422 = vrot.slane %v421, 2
    %v423 = vmax.f32 %v421, %v422
    %v424 = vrot.slane %v423, 1
    %v425 = vmax.f32 %v423, %v424
    %v426 = vsel %vm369, %v361, -inf
    %v427 = vrot.slane %v426, 4
    %v428 = vmax.f32 %v426, %v427
    %v429 = vrot.slane %v428, 2
    %v430 = vmax.f32 %v428, %v429
    %v431 = vrot.slane %v430, 1
    %v432 = vmax.f32 %v430, %v431
    %v433 = vsel %vm369, %v362, -inf
    %v434 = vrot.slane %v433, 4
    %v435 = vmax.f32 %v433, %v434
    %v436 = vrot.slane %v435, 2
    %v437 = vmax.f32 %v435, %v436
    %v438 = vrot.slane %v437, 1
    %v439 = vmax.f32 %v437, %v438
    %v440 = vsel %vm369, %v363, -inf
    %v441 = vrot.slane %v440, 4
    %v442 = vmax.f32 %v440, %v441
    %v443 = vrot.slane %v442, 2
    %v444 = vmax.f32 %v442, %v443
    %v445 = vrot.slane %v444, 1
    %v446 = vmax.f32 %v444, %v445
    %v447 = vsel %vm369, %v364, -inf
    %v448 = vrot.slane %v447, 4
    %v449 = vmax.f32 %v447, %v448
    %v450 = vrot.slane %v449, 2
    %v451 = vmax.f32 %v449, %v450
    %v452 = vrot.slane %v451, 1
    %v453 = vmax.f32 %v451, %v452
    %v454 = vsel %vm369, %v365, -inf
    %v455 = vrot.slane %v454, 4
    %v456 = vmax.f32 %v454, %v455
    %v457 = vrot.slane %v456, 2
    %v458 = vmax.f32 %v456, %v457
    %v459 = vrot.slane %v458, 1
    %v460 = vmax.f32 %v458, %v459
    %v461 = vsel %vm369, %v366, -inf
    %v462 = vrot.slane %v461, 4
    %v463 = vmax.f32 %v461, %v462
    %v464 = vrot.slane %v463, 2
    %v465 = vmax.f32 %v463, %v464
    %v466 = vrot.slane %v465, 1
    %v467 = vmax.f32 %v465, %v466
    %v468 = vsel %vm369, %v367, -inf
    %v469 = vrot.slane %v468, 4
    %v470 = vmax.f32 %v468, %v469
    %v471 = vrot.slane %v470, 2
    %v472 = vmax.f32 %v470, %v471
    %v473 = vrot.slane %v472, 1
    %v474 = vmax.f32 %v472, %v473
    %v475 = vsel %vm369, %v368, -inf
    %v476 = vrot.slane %v475, 4
    %v477 = vmax.f32 %v475, %v476
    %v478 = vrot.slane %v477, 2
    %v479 = vmax.f32 %v477, %v478
    %v480 = vrot.slane %v479, 1
    %v481 = vmax.f32 %v479, %v480
    %v482 = vsub.f32 %v353, %v376
    %v483 = vsub.f32 %v354, %v383
    %v484 = vsub.f32 %v355, %v390
    %v485 = vsub.f32 %v356, %v397
    %v486 = vsub.f32 %v357, %v404
    %v487 = vsub.f32 %v358, %v411
    %v488 = vsub.f32 %v359, %v418
    %v489 = vsub.f32 %v360, %v425
    %v490 = vsub.f32 %v361, %v432
    %v491 = vsub.f32 %v362, %v439
    %v492 = vsub.f32 %v363, %v446
    %v493 = vsub.f32 %v364, %v453
    %v494 = vsub.f32 %v365, %v460
    %v495 = vsub.f32 %v366, %v467
    %v496 = vsub.f32 %v367, %v474
    %v497 = vsub.f32 %v368, %v481
    %v498 = vmul.f32 %v482, 1.442695
    %v499 = vpow.pop %v498
    %v500 = vmul.f32 %v483, 1.442695
    %v501 = vpow.pop %v500
    %v502 = vmul.f32 %v484, 1.442695
    %v503 = vpow.pop %v502
    %v504 = vmul.f32 %v485, 1.442695
    %v505 = vpow.pop %v504
    %v506 = vmul.f32 %v486, 1.442695
    %v507 = vpow.pop %v506
    %v508 = vmul.f32 %v487, 1.442695
    %v509 = vpow.pop %v508
    %v510 = vmul.f32 %v488, 1.442695
    %v511 = vpow.pop %v510
    %v512 = vmul.f32 %v489, 1.442695
    %v513 = vpow.pop %v512
    %v514 = vmul.f32 %v490, 1.442695
    %v515 = vpow.pop %v514
    %v516 = vmul.f32 %v491, 1.442695
    %v517 = vpow.pop %v516
    %v518 = vmul.f32 %v492, 1.442695
    %v519 = vpow.pop %v518
    %v520 = vmul.f32 %v493, 1.442695
    %v521 = vpow.pop %v520
    %v522 = vmul.f32 %v494, 1.442695
    %v523 = vpow.pop %v522
    %v524 = vmul.f32 %v495, 1.442695
    %v525 = vpow.pop %v524
    %v526 = vmul.f32 %v496, 1.442695
    %v527 = vpow.pop %v526
    %v528 = vmul.f32 %v497, 1.442695
    %v529 = vpow.pop %v528
    %v530 = vsel %vm369, %v499, 0.0
    %v531 = vrot.slane %v530, 4
    %v532 = vadd.f32 %v530, %v531
    %v533 = vrot.slane %v532, 2
    %v534 = vadd.f32 %v532, %v533
    %v535 = vrot.slane %v534, 1
    %v536 = vadd.f32 %v534, %v535
    %v537 = vsel %vm369, %v501, 0.0
    %v538 = vrot.slane %v537, 4
    %v539 = vadd.f32 %v537, %v538
    %v540 = vrot.slane %v539, 2
    %v541 = vadd.f32 %v539, %v540
    %v542 = vrot.slane %v541, 1
    %v543 = vadd.f32 %v541, %v542
    %v544 = vsel %vm369, %v503, 0.0
    %v545 = vrot.slane %v544, 4
    %v546 = vadd.f32 %v544, %v545
    %v547 = vrot.slane %v546, 2
    %v548 = vadd.f32 %v546, %v547
    %v549 = vrot.slane %v548, 1
    %v550 = vadd.f32 %v548, %v549
    %v551 = vsel %vm369, %v505, 0.0
    %v552 = vrot.slane %v551, 4
    %v553 = vadd.f32 %v551, %v552
    %v554 = vrot.slane %v553, 2
    %v555 = vadd.f32 %v553, %v554
    %v556 = vrot.slane %v555, 1
    %v557 = vadd.f32 %v555, %v556
    %v558 = vsel %vm369, %v507, 0.0
    %v559 = vrot.slane %v558, 4
    %v560 = vadd.f32 %v558, %v559
    %v561 = vrot.slane %v560, 2
    %v562 = vadd.f32 %v560, %v561
    %v563 = vrot.slane %v562, 1
    %v564 = vadd.f32 %v562, %v563
    %v565 = vsel %vm369, %v509, 0.0
    %v566 = vrot.slane %v565, 4
    %v567 = vadd.f32 %v565, %v566
    %v568 = vrot.slane %v567, 2
    %v569 = vadd.f32 %v567, %v568
    %v570 = vrot.slane %v569, 1
    %v571 = vadd.f32 %v569, %v570
    %v572 = vsel %vm369, %v511, 0.0
    %v573 = vrot.slane %v572, 4
    %v574 = vadd.f32 %v572, %v573
    %v575 = vrot.slane %v574, 2
    %v576 = vadd.f32 %v574, %v575
    %v577 = vrot.slane %v576, 1
    %v578 = vadd.f32 %v576, %v577
    %v579 = vsel %vm369, %v513, 0.0
    %v580 = vrot.slane %v579, 4
    %v581 = vadd.f32 %v579, %v580
    %v582 = vrot.slane %v581, 2
    %v583 = vadd.f32 %v581, %v582
    %v584 = vrot.slane %v583, 1
    %v585 = vadd.f32 %v583, %v584
    %v586 = vsel %vm369, %v515, 0.0
    %v587 = vrot.slane %v586, 4
    %v588 = vadd.f32 %v586, %v587
    %v589 = vrot.slane %v588, 2
    %v590 = vadd.f32 %v588, %v589
    %v591 = vrot.slane %v590, 1
    %v592 = vadd.f32 %v590, %v591
    %v593 = vsel %vm369, %v517, 0.0
    %v594 = vrot.slane %v593, 4
    %v595 = vadd.f32 %v593, %v594
    %v596 = vrot.slane %v595, 2
    %v597 = vadd.f32 %v595, %v596
    %v598 = vrot.slane %v597, 1
    %v599 = vadd.f32 %v597, %v598
    %v600 = vsel %vm369, %v519, 0.0
    %v601 = vrot.slane %v600, 4
    %v602 = vadd.f32 %v600, %v601
    %v603 = vrot.slane %v602, 2
    %v604 = vadd.f32 %v602, %v603
    %v605 = vrot.slane %v604, 1
    %v606 = vadd.f32 %v604, %v605
    %v607 = vsel %vm369, %v521, 0.0
    %v608 = vrot.slane %v607, 4
    %v609 = vadd.f32 %v607, %v608
    %v610 = vrot.slane %v609, 2
    %v611 = vadd.f32 %v609, %v610
    %v612 = vrot.slane %v611, 1
    %v613 = vadd.f32 %v611, %v612
    %v614 = vsel %vm369, %v523, 0.0
    %v615 = vrot.slane %v614, 4
    %v616 = vadd.f32 %v614, %v615
    %v617 = vrot.slane %v616, 2
    %v618 = vadd.f32 %v616, %v617
    %v619 = vrot.slane %v618, 1
    %v620 = vadd.f32 %v618, %v619
    %v621 = vsel %vm369, %v525, 0.0
    %v622 = vrot.slane %v621, 4
    %v623 = vadd.f32 %v621, %v622
    %v624 = vrot.slane %v623, 2
    %v625 = vadd.f32 %v623, %v624
    %v626 = vrot.slane %v625, 1
    %v627 = vadd.f32 %v625, %v626
    %v628 = vsel %vm369, %v527, 0.0
    %v629 = vrot.slane %v628, 4
    %v630 = vadd.f32 %v628, %v629
    %v631 = vrot.slane %v630, 2
    %v632 = vadd.f32 %v630, %v631
    %v633 = vrot.slane %v632, 1
    %v634 = vadd.f32 %v632, %v633
    %v635 = vsel %vm369, %v529, 0.0
    %v636 = vrot.slane %v635, 4
    %v637 = vadd.f32 %v635, %v636
    %v638 = vrot.slane %v637, 2
    %v639 = vadd.f32 %v637, %v638
    %v640 = vrot.slane %v639, 1
    %v641 = vadd.f32 %v639, %v640
    %v642 = vrcp.pop %v536
    %v643 = vrcp.pop %v543
    %v644 = vrcp.pop %v550
    %v645 = vrcp.pop %v557
    %v646 = vrcp.pop %v564
    %v647 = vrcp.pop %v571
    %v648 = vrcp.pop %v578
    %v649 = vrcp.pop %v585
    %v650 = vrcp.pop %v592
    %v651 = vrcp.pop %v599
    %v652 = vrcp.pop %v606
    %v653 = vrcp.pop %v613
    %v654 = vrcp.pop %v620
    %v655 = vrcp.pop %v627
    %v656 = vrcp.pop %v634
    %v657 = vrcp.pop %v641
    %v658 = vmul.f32 %v499, %v642
    %v659 = vmul.f32 %v501, %v643
    %v660 = vmul.f32 %v503, %v644
    %v661 = vmul.f32 %v505, %v645
    %v662 = vmul.f32 %v507, %v646
    %v663 = vmul.f32 %v509, %v647
    %v664 = vmul.f32 %v511, %v648
    %v665 = vmul.f32 %v513, %v649
    %v666 = vmul.f32 %v515, %v650
    %v667 = vmul.f32 %v517, %v651
    %v668 = vmul.f32 %v519, %v652
    %v669 = vmul.f32 %v521, %v653
    %v670 = vmul.f32 %v523, %v654
    %v671 = vmul.f32 %v525, %v655
    %v672 = vmul.f32 %v527, %v656
    %v673 = vmul.f32 %v529, %v657
    %675 = vset.pattern.permute.xlu0 0
    %676 = vperm.xlu0 %675, %v658
    %v677 = vpop.permute.xlu0 %676
    %680 = vset.pattern.permute.xlu0 0
    %681 = vperm.xlu0 %680, %v659
    %v682 = vpop.permute.xlu0 %681
    %685 = vset.pattern.permute.xlu0 0
    %686 = vperm.xlu0 %685, %v660
    %v687 = vpop.permute.xlu0 %686
    %690 = vset.pattern.permute.xlu0 0
    %691 = vperm.xlu0 %690, %v661
    %v692 = vpop.permute.xlu0 %691
    %695 = vset.pattern.permute.xlu0 0
    %696 = vperm.xlu0 %695, %v662
    %v697 = vpop.permute.xlu0 %696
    %700 = vset.pattern.permute.xlu0 0
    %701 = vperm.xlu0 %700, %v663
    %v702 = vpop.permute.xlu0 %701
    %705 = vset.pattern.permute.xlu0 0
    %706 = vperm.xlu0 %705, %v664
    %v707 = vpop.permute.xlu0 %706
    %710 = vset.pattern.permute.xlu0 0
    %711 = vperm.xlu0 %710, %v665
    %v712 = vpop.permute.xlu0 %711
    %715 = vset.pattern.permute.xlu0 0
    %716 = vperm.xlu0 %715, %v666
    %v717 = vpop.permute.xlu0 %716
    %720 = vset.pattern.permute.xlu0 0
    %721 = vperm.xlu0 %720, %v667
    %v722 = vpop.permute.xlu0 %721
    %725 = vset.pattern.permute.xlu0 0
    %726 = vperm.xlu0 %725, %v668
    %v727 = vpop.permute.xlu0 %726
    %730 = vset.pattern.permute.xlu0 0
    %731 = vperm.xlu0 %730, %v669
    %v732 = vpop.permute.xlu0 %731
    %735 = vset.pattern.permute.xlu0 0
    %736 = vperm.xlu0 %735, %v670
    %v737 = vpop.permute.xlu0 %736
    %740 = vset.pattern.permute.xlu0 0
    %741 = vperm.xlu0 %740, %v671
    %v742 = vpop.permute.xlu0 %741
    %745 = vset.pattern.permute.xlu0 0
    %746 = vperm.xlu0 %745, %v672
    %v747 = vpop.permute.xlu0 %746
    %750 = vset.pattern.permute.xlu0 0
    %751 = vperm.xlu0 %750, %v673
    %v752 = vpop.permute.xlu0 %751
    %v754 = vmul.f32 %v37, %v677
    %v755 = vmul.f32 %v38, %v682
    %v756 = vmul.f32 %v39, %v687
    %v757 = vmul.f32 %v40, %v692
    %v758 = vmul.f32 %v41, %v697
    %v759 = vmul.f32 %v42, %v702
    %v760 = vmul.f32 %v43, %v707
    %v761 = vmul.f32 %v44, %v712
    %v762 = vmul.f32 %v45, %v717
    %v763 = vmul.f32 %v46, %v722
    %v764 = vmul.f32 %v47, %v727
    %v765 = vmul.f32 %v48, %v732
    %v766 = vmul.f32 %v49, %v737
    %v767 = vmul.f32 %v50, %v742
    %v768 = vmul.f32 %v51, %v747
    %v769 = vmul.f32 %v52, %v752
    %v770 = vsel %vm64, %v754, 0.0
    %v771 = vrot.slane %v770, 4
    %v772 = vadd.f32 %v770, %v771
    %v773 = vrot.slane %v772, 2
    %v774 = vadd.f32 %v772, %v773
    %v775 = vrot.slane %v774, 1
    %v776 = vadd.f32 %v774, %v775
    %v777 = vsel %vm64, %v755, 0.0
    %v778 = vrot.slane %v777, 4
    %v779 = vadd.f32 %v777, %v778
    %v780 = vrot.slane %v779, 2
    %v781 = vadd.f32 %v779, %v780
    %v782 = vrot.slane %v781, 1
    %v783 = vadd.f32 %v781, %v782
    %v784 = vsel %vm64, %v756, 0.0
    %v785 = vrot.slane %v784, 4
    %v786 = vadd.f32 %v784, %v785
    %v787 = vrot.slane %v786, 2
    %v788 = vadd.f32 %v786, %v787
    %v789 = vrot.slane %v788, 1
    %v790 = vadd.f32 %v788, %v789
    %v791 = vsel %vm64, %v757, 0.0
    %v792 = vrot.slane %v791, 4
    %v793 = vadd.f32 %v791, %v792
    %v794 = vrot.slane %v793, 2
    %v795 = vadd.f32 %v793, %v794
    %v796 = vrot.slane %v795, 1
    %v797 = vadd.f32 %v795, %v796
    %v798 = vsel %vm64, %v758, 0.0
    %v799 = vrot.slane %v798, 4
    %v800 = vadd.f32 %v798, %v799
    %v801 = vrot.slane %v800, 2
    %v802 = vadd.f32 %v800, %v801
    %v803 = vrot.slane %v802, 1
    %v804 = vadd.f32 %v802, %v803
    %v805 = vsel %vm64, %v759, 0.0
    %v806 = vrot.slane %v805, 4
    %v807 = vadd.f32 %v805, %v806
    %v808 = vrot.slane %v807, 2
    %v809 = vadd.f32 %v807, %v808
    %v810 = vrot.slane %v809, 1
    %v811 = vadd.f32 %v809, %v810
    %v812 = vsel %vm64, %v760, 0.0
    %v813 = vrot.slane %v812, 4
    %v814 = vadd.f32 %v812, %v813
    %v815 = vrot.slane %v814, 2
    %v816 = vadd.f32 %v814, %v815
    %v817 = vrot.slane %v816, 1
    %v818 = vadd.f32 %v816, %v817
    %v819 = vsel %vm64, %v761, 0.0
    %v820 = vrot.slane %v819, 4
    %v821 = vadd.f32 %v819, %v820
    %v822 = vrot.slane %v821, 2
    %v823 = vadd.f32 %v821, %v822
    %v824 = vrot.slane %v823, 1
    %v825 = vadd.f32 %v823, %v824
    %v826 = vsel %vm64, %v762, 0.0
    %v827 = vrot.slane %v826, 4
    %v828 = vadd.f32 %v826, %v827
    %v829 = vrot.slane %v828, 2
    %v830 = vadd.f32 %v828, %v829
    %v831 = vrot.slane %v830, 1
    %v832 = vadd.f32 %v830, %v831
    %v833 = vsel %vm64, %v763, 0.0
    %v834 = vrot.slane %v833, 4
    %v835 = vadd.f32 %v833, %v834
    %v836 = vrot.slane %v835, 2
    %v837 = vadd.f32 %v835, %v836
    %v838 = vrot.slane %v837, 1
    %v839 = vadd.f32 %v837, %v838
    %v840 = vsel %vm64, %v764, 0.0
    %v841 = vrot.slane %v840, 4
    %v842 = vadd.f32 %v840, %v841
    %v843 = vrot.slane %v842, 2
    %v844 = vadd.f32 %v842, %v843
    %v845 = vrot.slane %v844, 1
    %v846 = vadd.f32 %v844, %v845
    %v847 = vsel %vm64, %v765, 0.0
    %v848 = vrot.slane %v847, 4
    %v849 = vadd.f32 %v847, %v848
    %v850 = vrot.slane %v849, 2
    %v851 = vadd.f32 %v849, %v850
    %v852 = vrot.slane %v851, 1
    %v853 = vadd.f32 %v851, %v852
    %v854 = vsel %vm64, %v766, 0.0
    %v855 = vrot.slane %v854, 4
    %v856 = vadd.f32 %v854, %v855
    %v857 = vrot.slane %v856, 2
    %v858 = vadd.f32 %v856, %v857
    %v859 = vrot.slane %v858, 1
    %v860 = vadd.f32 %v858, %v859
    %v861 = vsel %vm64, %v767, 0.0
    %v862 = vrot.slane %v861, 4
    %v863 = vadd.f32 %v861, %v862
    %v864 = vrot.slane %v863, 2
    %v865 = vadd.f32 %v863, %v864
    %v866 = vrot.slane %v865, 1
    %v867 = vadd.f32 %v865, %v866
    %v868 = vsel %vm64, %v768, 0.0
    %v869 = vrot.slane %v868, 4
    %v870 = vadd.f32 %v868, %v869
    %v871 = vrot.slane %v870, 2
    %v872 = vadd.f32 %v870, %v871
    %v873 = vrot.slane %v872, 1
    %v874 = vadd.f32 %v872, %v873
    %v875 = vsel %vm64, %v769, 0.0
    %v876 = vrot.slane %v875, 4
    %v877 = vadd.f32 %v875, %v876
    %v878 = vrot.slane %v877, 2
    %v879 = vadd.f32 %v877, %v878
    %v880 = vrot.slane %v879, 1
    %v881 = vadd.f32 %v879, %v880
    %vm898 = vcmask 1041409
    %v899 = vsel %vm898, %v783, %v776
    %vm900 = vcmask 1042434
    %v901 = vsel %vm900, %v790, %v899
    %vm902 = vcmask 1043459
    %v903 = vsel %vm902, %v797, %v901
    %vm904 = vcmask 1044484
    %v905 = vsel %vm904, %v804, %v903
    %vm906 = vcmask 1045509
    %v907 = vsel %vm906, %v811, %v905
    %vm908 = vcmask 1046534
    %v909 = vsel %vm908, %v818, %v907
    %vm910 = vcmask 1047559
    %v911 = vsel %vm910, %v825, %v909
    %v912 = vsel %vm898, %v839, %v832
    %v913 = vsel %vm900, %v846, %v912
    %v914 = vsel %vm902, %v853, %v913
    %v915 = vsel %vm904, %v860, %v914
    %v916 = vsel %vm906, %v867, %v915
    %v917 = vsel %vm908, %v874, %v916
    %v918 = vsel %vm910, %v881, %v917
    %921 = vst.msk [vmem:[#allocation6] sm:$0xff] %vm64, %v911
    %922 = vst.msk [vmem:[#allocation6 + $0x8] sm:$0xff] %vm64, %v918
    // Predicated region
    $region26: #{tpu_custom_call.1} parent=1 // pred_check
      _
    $region27: #{tpu_custom_call.1} parent=1 // pred_check_branch
      %924 = sbr.rel (0) target = $region29
    $region28: #{tpu_custom_call.1} parent=1 // pred_region
      %s926 = ssub.s32 256, 256
      %927 = vsyncadd [#allocation5], %s926
      %s928 = sshll.u32 [#allocation6], 4
      %s929 = int_to_ptr.vmem [resolvable:$true] %s928
      %934 = dma.vmem_to_hbm [thread:$0]  %s929, 256, %s5, [#allocation5], 128, 128, 8
    $region29: #{tpu_custom_call.1} parent=1 // pred_fallthru
      _
    // Predicated region
    $region30: #{tpu_custom_call.1} parent=1 // pred_check
      _
    $region31: #{tpu_custom_call.1} parent=1 // pred_check_branch
      %936 = sbr.rel (0) target = $region33
    $region32: #{tpu_custom_call.1} parent=1 // pred_region
      %937 = dma.done [#allocation5], 256
    $region33: #{tpu_custom_call.1} parent=1 // pred_fallthru
      _
    %938 = vsyncpa [#allocation4], 1
    %939 = vsyncpa [#allocation5], 1

</llo_original>
